<compile_context>
chip_gen: v7x
topology: tpu7x:2x2x1
jax: 0.10.0
libtpu: 0.0.40
codegen_flags: <defaults>
</compile_context>

<pallas_src>
import functools

import jax
import jax.numpy as jnp
from jax.experimental import pallas as pl
from jax.experimental.pallas import tpu as pltpu

PAD_ID = 0      # token_to_id['<pad>']
LANES = 128


def _vmem_capacity_bytes():
    """Per-TensorCore VMEM capacity; conservative fallback = v7x's 64 MiB."""
    try:
        return int(pltpu.get_tpu_info().vmem_capacity_bytes)
    except Exception:
        return 64 * 1024 * 1024


# ----------------------------------------------------------------------------
# Fused kernel: cross-entropy (ignore_index) + masked-MSE partial reductions.
# Grid = (row tiles,), all "parallel".  Each tile writes its own (8,128) block
# with the four partial sums packed into lanes 0..3 (lane-dense, unmasked vst).
# ----------------------------------------------------------------------------
def _loss_kernel(logits_ref, tgt_ref, side_ref, out_ref, *, n_rows):
    pid = pl.program_id(0)

    lg = logits_ref[...]                                         # (TM, V) native dtype
    tm, v = lg.shape
    tgt = tgt_ref[...]                                           # (TM, 1) int32

    row = pid * tm + jax.lax.broadcasted_iota(jnp.int32, (tm, 1), 0)
    in_bounds = row < n_rows                                     # ragged-tile mask

    # --- cross entropy with ignore_index (target-logit fused into the exp pass) ---
    m = jnp.max(lg, axis=-1, keepdims=True)                      # row max, native dtype
    shifted = (lg - m).astype(jnp.float32)                       # single upcast of tile
    col = jax.lax.broadcasted_iota(jnp.int32, (tm, v), 1)
    sumexp = jnp.sum(jnp.exp(shifted), axis=-1, keepdims=True)
    tgt_shift = jnp.sum(jnp.where(col == tgt, shifted, 0.0), axis=-1, keepdims=True)
    per_row = jnp.log(sumexp) - tgt_shift                        # = lse - logit[target]

    ce_valid = jnp.logical_and(tgt != PAD_ID, in_bounds)
    # where-SELECT (not multiply): garbage NaN/Inf in out-of-bounds rows is dropped.
    ce_sum = jnp.sum(jnp.where(ce_valid, per_row, 0.0))
    ce_cnt = jnp.sum(jnp.where(ce_valid, 1.0, 0.0))

    # --- masked MSE (packed side input rides the same row grid) ---
    side = side_ref[...].astype(jnp.float32)                     # (TM, 3): vp, vt, mask
    vp = side[:, 0:1]
    vt = side[:, 1:2]
    vm = side[:, 2:3]
    mse_valid = jnp.logical_and(vm > 0.5, in_bounds)
    d = vp - vt
    sq = jnp.sum(jnp.where(mse_valid, d * d, 0.0))
    cnt = jnp.sum(jnp.where(mse_valid, 1.0, 0.0))

    # pack the four partial sums into one lane-dense (8,128) block
    lane = jax.lax.broadcasted_iota(jnp.int32, (8, LANES), 1)
    out_ref[...] = (jnp.where(lane == 0, ce_sum, 0.0)
                    + jnp.where(lane == 1, ce_cnt, 0.0)
                    + jnp.where(lane == 2, sq, 0.0)
                    + jnp.where(lane == 3, cnt, 0.0))


def _ce_tiling(n_rows, vocab, itemsize):
    """(rows_per_tile, num_tiles): dtype- and generation-aware tile sizing.

    Double-buffered logits tile budget = VMEM/4 (16 MiB on v7x, 32 MiB on v5e/v6e).
    """
    budget = _vmem_capacity_bytes() // 4
    tm = budget // (2 * vocab * itemsize)
    tm = max(8, min(1024, (tm // 8) * 8))
    if n_rows < 8:
        return n_rows, 1                       # block == full array dims (allowed)
    tm = min(tm, (n_rows // 8) * 8)            # keep block rows <= array rows
    return tm, pl.cdiv(n_rows, tm)             # ragged last tile masked in-kernel


def fused_losses(token_preds, token_targets, value_preds, value_targets, value_mask):
    v = token_preds.shape[-1]
    logits = token_preds.reshape(-1, v)                  # native dtype, no upcast
    n = logits.shape[0]
    tgt = token_targets.reshape(-1, 1).astype(jnp.int32)
    side = jnp.stack(                                     # (N, 3): vp, vt, mask
        [value_preds.reshape(-1).astype(jnp.float32),
         value_targets.reshape(-1).astype(jnp.float32),
         value_mask.reshape(-1).astype(jnp.float32)], axis=-1)

    itemsize = jnp.dtype(token_preds.dtype).itemsize
    tm, n_tiles = _ce_tiling(n, v, itemsize)
    cap = _vmem_capacity_bytes()
    vmem_limit = min(3 * cap // 4, 96 * 1024 * 1024)

    # TODO(synk): if an xprof trace on v5e shows exposed DMA at grid-step boundaries,
    # add pipeline_mode=pl.Buffered(3) on the logits BlockSpec.
    out = pl.pallas_call(
        functools.partial(_loss_kernel, n_rows=n),
        grid=(n_tiles,),
        in_specs=[
            pl.BlockSpec((tm, v), lambda i: (i, 0)),
            pl.BlockSpec((tm, 1), lambda i: (i, 0)),
            pl.BlockSpec((tm, 3), lambda i: (i, 0)),
        ],
        out_specs=pl.BlockSpec((8, LANES), lambda i: (i, 0)),
        out_shape=jax.ShapeDtypeStruct((n_tiles * 8, LANES), jnp.float32),
        compiler_params=pltpu.CompilerParams(
            dimension_semantics=("parallel",),
            vmem_limit_bytes=vmem_limit,
        ),
    )(logits, tgt, side)

    blocks = out.reshape(n_tiles, 8, LANES)
    ce_sum = jnp.sum(blocks[:, 0, 0])
    ce_cnt = jnp.sum(blocks[:, 0, 1])
    sq = jnp.sum(blocks[:, 0, 2])
    cnt = jnp.sum(blocks[:, 0, 3])

    # NaN if every target is <pad> (ce_cnt==0), matching PyTorch CrossEntropyLoss.
    classification_loss = ce_sum / ce_cnt
    regression_loss = jnp.where(cnt > 0, sq / cnt, jnp.float32(0.0))
    return classification_loss, regression_loss


def mgda_loss_forward(token_preds, token_targets, value_preds, value_targets, value_mask):
    classification_loss, regression_loss = fused_losses(
        token_preds, token_targets, value_preds, value_targets, value_mask)
    combined_loss = (classification_loss + regression_loss) / 2.0
    return combined_loss, classification_loss, regression_loss


# ----------------------------------------------------------------------------
# MGDA gradient combination:  param.grad = 0.5 * g_class + 0.5 * g_regr
# Per-tensor elementwise kernel on a free (merge-leading-dims) 2-D view: no
# concat / pad / slice staging, no extra HBM copies of the gradients.
# ----------------------------------------------------------------------------
def _grad_combine_kernel(gc_ref, gr_ref, out_ref):
    gc = gc_ref[...].astype(jnp.float32)
    gr = gr_ref[...].astype(jnp.float32)
    out_ref[...] = (0.5 * gc + 0.5 * gr).astype(out_ref.dtype)


def _combine_one(gc, gr):
    shape = gr.shape
    out_dtype = gr.dtype            # grad dtype follows the regression grad / param dtype
    if gr.ndim == 0:
        gc2, gr2 = gc.reshape(1, 1), gr.reshape(1, 1)
    elif gr.ndim == 1:
        gc2, gr2 = gc.reshape(1, -1), gr.reshape(1, -1)
    else:
        gc2, gr2 = gc.reshape(-1, shape[-1]), gr.reshape(-1, shape[-1])
    r, c = gr2.shape

    budget = 4 * 1024 * 1024        # ~4 MiB per input block
    itemsize = max(jnp.dtype(gc2.dtype).itemsize, jnp.dtype(gr2.dtype).itemsize)
    tm = budget // max(1, c * itemsize)
    if r >= 8:
        tm = min((r // 8) * 8, max(8, (tm // 8) * 8))
    else:
        tm = r
    n_tiles = pl.cdiv(r, tm)

    out = pl.pallas_call(
        _grad_combine_kernel,
        grid=(n_tiles,),
        in_specs=[pl.BlockSpec((tm, c), lambda i: (i, 0)),
                  pl.BlockSpec((tm, c), lambda i: (i, 0))],
        out_specs=pl.BlockSpec((tm, c), lambda i: (i, 0)),
        out_shape=jax.ShapeDtypeStruct((r, c), out_dtype),
        compiler_params=pltpu.CompilerParams(
            dimension_semantics=("parallel",),
            vmem_limit_bytes=48 * 1024 * 1024,
        ),
    )(gc2, gr2)
    return out.reshape(shape)


def mgda_combine_grads(class_grads, regr_grads):
    return [_combine_one(gc, gr) for gc, gr in zip(class_grads, regr_grads)]


# ----------------------------------------------------------------------------
# pure-JAX references for correctness checks
# ----------------------------------------------------------------------------
def _ce_ref(token_preds, token_targets):
    v = token_preds.shape[-1]
    logits = token_preds.reshape(-1, v).astype(jnp.float32)
    tgt = token_targets.reshape(-1).astype(jnp.int32)
    logp = jax.nn.log_softmax(logits, axis=-1)
    per = -jnp.take_along_axis(logp, tgt[:, None], axis=-1)[:, 0]
    valid = (tgt != PAD_ID).astype(jnp.float32)
    return jnp.sum(per * valid) / jnp.sum(valid)


def _mse_ref(value_preds, value_targets, value_mask):
    m = value_mask.astype(jnp.float32)
    d = (value_preds.astype(jnp.float32) - value_targets.astype(jnp.float32)) * m
    cnt = jnp.sum(m)
    return jnp.where(cnt > 0, jnp.sum(d * d) / cnt, 0.0)


if __name__ == "__main__":
    key = jax.random.PRNGKey(0)
    ks = jax.random.split(key, 12)

    B, T, V = 2, 8, 32   # small shapes; V stands in for len(token_to_id)

    token_preds = jax.random.normal(ks[0], (B, T, V), dtype=jnp.float32)
    token_targets = jax.random.randint(ks[1], (B, T), 0, V, dtype=jnp.int32)
    token_targets = token_targets.at[:, -2:].set(PAD_ID)    # exercise ignore_index
    token_targets = token_targets.at[0, 0].set(3)            # at least one non-pad

    value_preds = jax.random.normal(ks[2], (B, T), dtype=jnp.float32)
    value_targets = jax.random.normal(ks[3], (B, T), dtype=jnp.float32)
    value_mask = jax.random.uniform(ks[4], (B, T)) > 0.4
    value_mask = value_mask.at[0, 0].set(True)                # non-empty selection

    combined, cls_loss, regr_loss = mgda_loss_forward(
        token_preds, token_targets, value_preds, value_targets, value_mask)
    jax.block_until_ready((combined, cls_loss, regr_loss))

    cls_ref = _ce_ref(token_preds, token_targets)
    regr_ref = _mse_ref(value_preds, value_targets, value_mask)
    comb_ref = (cls_ref + regr_ref) / 2.0
    assert jnp.allclose(cls_loss, cls_ref, atol=1e-4, rtol=1e-4), (cls_loss, cls_ref)
    assert jnp.allclose(regr_loss, regr_ref, atol=1e-4, rtol=1e-4), (regr_loss, regr_ref)
    assert jnp.allclose(combined, comb_ref, atol=1e-4, rtol=1e-4), (combined, comb_ref)

    # MGDA gradient combination on synthetic per-parameter gradients
    # (stand-in for torch.autograd.grad w.r.t. model.parameters(); see TODO above).
    gshapes = [(256, 256), (256,), (16, 32, 4)]
    class_grads = [jax.random.normal(k, s, dtype=jnp.float32)
                   for k, s in zip(ks[5:8], gshapes)]
    regr_grads = [jax.random.normal(k, s, dtype=jnp.float32)
                  for k, s in zip(ks[8:11], gshapes)]
    combined_grads = mgda_combine_grads(class_grads, regr_grads)
    jax.block_until_ready(combined_grads)
    for g_out, g_c, g_r in zip(combined_grads, class_grads, regr_grads):
        ref = 0.5 * g_c + 0.5 * g_r
        assert jnp.allclose(g_out, ref, atol=1e-5, rtol=1e-5)
        assert bool(jnp.all(jnp.isfinite(g_out)))

    print("KERNEL_OK")
</pallas_src>

<mosaic_0001>
module attributes {stable_mosaic.version = 11 : i64} {
  func.func @_loss_kernel(%arg0: i32, %arg1: memref<16x32xf32, #tpu.memory_space<vmem>>, %arg2: memref<16x1xi32, #tpu.memory_space<vmem>>, %arg3: memref<16x3xf32, #tpu.memory_space<vmem>>, %arg4: memref<8x128xf32, #tpu.memory_space<vmem>>) attributes {dimension_semantics = [#tpu.dimension_semantics<parallel>], iteration_bounds = array<i64: 1>, scalar_prefetch = 0 : i64, scratch_operands = 0 : i64, tpu.core_type = #tpu.core_type<tc>, window_params = [{transform_indices = @transform_0, window_bounds = array<i64: 16, 32>}, {transform_indices = @transform_1, window_bounds = array<i64: 16, 1>}, {transform_indices = @transform_2, window_bounds = array<i64: 16, 3>}, {transform_indices = @transform_3, window_bounds = array<i64: 8, 128>}]} {
    %c0 = arith.constant 0 : index
    %c0_0 = arith.constant 0 : index
    %0 = vector.load %arg1[%c0, %c0_0] : memref<16x32xf32, #tpu.memory_space<vmem>>, vector<16x32xf32>
    %c0_1 = arith.constant 0 : index
    %c0_2 = arith.constant 0 : index
    %1 = vector.load %arg2[%c0_1, %c0_2] : memref<16x1xi32, #tpu.memory_space<vmem>>, vector<16x1xi32>
    %c16_i32 = arith.constant 16 : i32
    %2 = arith.muli %arg0, %c16_i32 : i32
    %3 = tpu.iota {dimensions = array<i32: 0>} : vector<16x1xi32>
    %4 = vector.broadcast %2 : i32 to vector<16x1xi32>
    %5 = arith.addi %4, %3 : vector<16x1xi32>
    %c16_i32_3 = arith.constant 16 : i32
    %6 = vector.broadcast %c16_i32_3 : i32 to vector<16x1xi32>
    %7 = arith.cmpi slt, %5, %6 : vector<16x1xi32>
    %cst = arith.constant dense<0xFF800000> : vector<16xf32>
    %8 = vector.multi_reduction <maximumf>, %0, %cst [1] : vector<16x32xf32> to vector<16xf32>
    %9 = vector.shape_cast %8 : vector<16xf32> to vector<16x1xf32>
    %10 = vector.broadcast %9 : vector<16x1xf32> to vector<16x32xf32>
    %11 = arith.subf %0, %10 : vector<16x32xf32>
    %12 = tpu.iota {dimensions = array<i32: 1>} : vector<16x32xi32>
    %13 = math.exp %11 : vector<16x32xf32>
    %cst_4 = arith.constant dense<0.000000e+00> : vector<16xf32>
    %14 = vector.multi_reduction <add>, %13, %cst_4 [1] : vector<16x32xf32> to vector<16xf32>
    %15 = vector.shape_cast %14 : vector<16xf32> to vector<16x1xf32>
    %16 = vector.broadcast %1 : vector<16x1xi32> to vector<16x32xi32>
    %17 = arith.cmpi eq, %12, %16 : vector<16x32xi32>
    %cst_5 = arith.constant 0.000000e+00 : f32
    %18 = vector.broadcast %cst_5 : f32 to vector<16x32xf32>
    %19 = arith.select %17, %11, %18 : vector<16x32xi1>, vector<16x32xf32>
    %cst_6 = arith.constant dense<0.000000e+00> : vector<16xf32>
    %20 = vector.multi_reduction <add>, %19, %cst_6 [1] : vector<16x32xf32> to vector<16xf32>
    %21 = vector.shape_cast %20 : vector<16xf32> to vector<16x1xf32>
    %22 = math.log %15 : vector<16x1xf32>
    %23 = arith.subf %22, %21 : vector<16x1xf32>
    %c0_i32 = arith.constant 0 : i32
    %24 = vector.broadcast %c0_i32 : i32 to vector<16x1xi32>
    %25 = arith.cmpi ne, %1, %24 : vector<16x1xi32>
    %26 = arith.andi %25, %7 : vector<16x1xi1>
    %cst_7 = arith.constant 0.000000e+00 : f32
    %27 = vector.broadcast %cst_7 : f32 to vector<16x1xf32>
    %28 = arith.select %26, %23, %27 : vector<16x1xi1>, vector<16x1xf32>
    %29 = vector.shape_cast %28 : vector<16x1xf32> to vector<1x16x1xf32>
    %cst_8 = arith.constant dense<0.000000e+00> : vector<1xf32>
    %30 = vector.multi_reduction <add>, %29, %cst_8 [1, 2] : vector<1x16x1xf32> to vector<1xf32>
    %31 = vector.shape_cast %30 : vector<1xf32> to vector<1x1x1xf32>
    %32 = vector.extract %31[0, 0, 0] : f32 from vector<1x1x1xf32>
    %cst_9 = arith.constant 1.000000e+00 : f32
    %cst_10 = arith.constant 0.000000e+00 : f32
    %33 = vector.broadcast %cst_9 : f32 to vector<16x1xf32>
    %34 = vector.broadcast %cst_10 : f32 to vector<16x1xf32>
    %35 = arith.select %26, %33, %34 : vector<16x1xi1>, vector<16x1xf32>
    %36 = vector.shape_cast %35 : vector<16x1xf32> to vector<1x16x1xf32>
    %cst_11 = arith.constant dense<0.000000e+00> : vector<1xf32>
    %37 = vector.multi_reduction <add>, %36, %cst_11 [1, 2] : vector<1x16x1xf32> to vector<1xf32>
    %38 = vector.shape_cast %37 : vector<1xf32> to vector<1x1x1xf32>
    %39 = vector.extract %38[0, 0, 0] : f32 from vector<1x1x1xf32>
    %c0_12 = arith.constant 0 : index
    %c0_13 = arith.constant 0 : index
    %40 = vector.load %arg3[%c0_12, %c0_13] : memref<16x3xf32, #tpu.memory_space<vmem>>, vector<16x3xf32>
    %41 = vector.extract_strided_slice %40 {offsets = [0, 0], sizes = [16, 1], strides = [1, 1]} : vector<16x3xf32> to vector<16x1xf32>
    %42 = vector.extract_strided_slice %40 {offsets = [0, 1], sizes = [16, 1], strides = [1, 1]} : vector<16x3xf32> to vector<16x1xf32>
    %43 = vector.extract_strided_slice %40 {offsets = [0, 2], sizes = [16, 1], strides = [1, 1]} : vector<16x3xf32> to vector<16x1xf32>
    %cst_14 = arith.constant 5.000000e-01 : f32
    %44 = vector.broadcast %cst_14 : f32 to vector<16x1xf32>
    %45 = arith.cmpf ogt, %43, %44 : vector<16x1xf32>
    %46 = arith.andi %45, %7 : vector<16x1xi1>
    %47 = arith.subf %41, %42 : vector<16x1xf32>
    %48 = arith.mulf %47, %47 : vector<16x1xf32>
    %cst_15 = arith.constant 0.000000e+00 : f32
    %49 = vector.broadcast %cst_15 : f32 to vector<16x1xf32>
    %50 = arith.select %46, %48, %49 : vector<16x1xi1>, vector<16x1xf32>
    %51 = vector.shape_cast %50 : vector<16x1xf32> to vector<1x16x1xf32>
    %cst_16 = arith.constant dense<0.000000e+00> : vector<1xf32>
    %52 = vector.multi_reduction <add>, %51, %cst_16 [1, 2] : vector<1x16x1xf32> to vector<1xf32>
    %53 = vector.shape_cast %52 : vector<1xf32> to vector<1x1x1xf32>
    %54 = vector.extract %53[0, 0, 0] : f32 from vector<1x1x1xf32>
    %cst_17 = arith.constant 1.000000e+00 : f32
    %cst_18 = arith.constant 0.000000e+00 : f32
    %55 = vector.broadcast %cst_17 : f32 to vector<16x1xf32>
    %56 = vector.broadcast %cst_18 : f32 to vector<16x1xf32>
    %57 = arith.select %46, %55, %56 : vector<16x1xi1>, vector<16x1xf32>
    %58 = vector.shape_cast %57 : vector<16x1xf32> to vector<1x16x1xf32>
    %cst_19 = arith.constant dense<0.000000e+00> : vector<1xf32>
    %59 = vector.multi_reduction <add>, %58, %cst_19 [1, 2] : vector<1x16x1xf32> to vector<1xf32>
    %60 = vector.shape_cast %59 : vector<1xf32> to vector<1x1x1xf32>
    %61 = vector.extract %60[0, 0, 0] : f32 from vector<1x1x1xf32>
    %62 = tpu.iota {dimensions = array<i32: 1>} : vector<8x128xi32>
    %c0_i32_20 = arith.constant 0 : i32
    %63 = vector.broadcast %c0_i32_20 : i32 to vector<8x128xi32>
    %64 = arith.cmpi eq, %62, %63 : vector<8x128xi32>
    %cst_21 = arith.constant 0.000000e+00 : f32
    %65 = vector.broadcast %32 : f32 to vector<8x128xf32>
    %66 = vector.broadcast %cst_21 : f32 to vector<8x128xf32>
    %67 = arith.select %64, %65, %66 : vector<8x128xi1>, vector<8x128xf32>
    %c1_i32 = arith.constant 1 : i32
    %68 = vector.broadcast %c1_i32 : i32 to vector<8x128xi32>
    %69 = arith.cmpi eq, %62, %68 : vector<8x128xi32>
    %cst_22 = arith.constant 0.000000e+00 : f32
    %70 = vector.broadcast %39 : f32 to vector<8x128xf32>
    %71 = vector.broadcast %cst_22 : f32 to vector<8x128xf32>
    %72 = arith.select %69, %70, %71 : vector<8x128xi1>, vector<8x128xf32>
    %73 = arith.addf %67, %72 : vector<8x128xf32>
    %c2_i32 = arith.constant 2 : i32
    %74 = vector.broadcast %c2_i32 : i32 to vector<8x128xi32>
    %75 = arith.cmpi eq, %62, %74 : vector<8x128xi32>
    %cst_23 = arith.constant 0.000000e+00 : f32
    %76 = vector.broadcast %54 : f32 to vector<8x128xf32>
    %77 = vector.broadcast %cst_23 : f32 to vector<8x128xf32>
    %78 = arith.select %75, %76, %77 : vector<8x128xi1>, vector<8x128xf32>
    %79 = arith.addf %73, %78 : vector<8x128xf32>
    %c3_i32 = arith.constant 3 : i32
    %80 = vector.broadcast %c3_i32 : i32 to vector<8x128xi32>
    %81 = arith.cmpi eq, %62, %80 : vector<8x128xi32>
    %cst_24 = arith.constant 0.000000e+00 : f32
    %82 = vector.broadcast %61 : f32 to vector<8x128xf32>
    %83 = vector.broadcast %cst_24 : f32 to vector<8x128xf32>
    %84 = arith.select %81, %82, %83 : vector<8x128xi1>, vector<8x128xf32>
    %85 = arith.addf %79, %84 : vector<8x128xf32>
    %c0_25 = arith.constant 0 : index
    %c0_26 = arith.constant 0 : index
    %86 = vector.load %arg4[%c0_25, %c0_26] : memref<8x128xf32, #tpu.memory_space<vmem>>, vector<8x128xf32>
    tpu.vector_store %arg4[%c0_25, %c0_26], %85 {strides = array<i32>} : memref<8x128xf32, #tpu.memory_space<vmem>>, vector<8x128xf32>,
    return
  }
  func.func @transform_0(%arg0: i32) -> (i32, i32) {
    %c0_i32 = arith.constant 0 : i32
    %c0_i32_0 = arith.constant 0 : i32
    return %arg0, %c0_i32 : i32, i32
  }
  func.func @transform_1(%arg0: i32) -> (i32, i32) {
    %c0_i32 = arith.constant 0 : i32
    %c0_i32_0 = arith.constant 0 : i32
    return %arg0, %c0_i32 : i32, i32
  }
  func.func @transform_2(%arg0: i32) -> (i32, i32) {
    %c0_i32 = arith.constant 0 : i32
    %c0_i32_0 = arith.constant 0 : i32
    return %arg0, %c0_i32 : i32, i32
  }
  func.func @transform_3(%arg0: i32) -> (i32, i32) {
    %c0_i32 = arith.constant 0 : i32
    %c0_i32_0 = arith.constant 0 : i32
    return %arg0, %c0_i32 : i32, i32
  }
}

</mosaic_0001>

<llo_original>
// kernel: tpu_custom_call.1
$region0: #{tpu_custom_call.1}
  #allocation0 [shape = 'u32[]', space=smem, size = 0x4, offset = 0x4, fixed_abs, tag = 'smem constant byte address 0x4 - core index']
  #allocation1 [shape = 'u32[144,128]{1,0:T(1,128)}', space=vmem, size = 0x12000, scoped, tag = 'internal scratch']
  %s0 = inlined_call_operand.vmem [shape: f32[16,32], index: 0, kind: input, shape index: {}]
  %s1 = inlined_call_operand.vmem [shape: s32[16,1], index: 1, kind: input, shape index: {}]
  %s2 = inlined_call_operand.vmem [shape: f32[16,3], index: 2, kind: input, shape index: {}]
  %s3 = inlined_call_operand.hbm [shape: f32[8,128], index: 3, kind: output, shape index: {}]
  %s4 = sld [smem:[#allocation0]]
  $region22: #{tpu_custom_call.1} parent=0
    _
  %s6 = ssub.s32 1, %s4
  %s7 = scalar_select 0, %s6, %s4
  $region1: #{tpu_custom_call.1} parent=0
    #allocation2 [shape = 'u8[4096]{0}', space=vmem, size = 0x1000, scoped, tag = 'output window, operand 0, single buffered']
    #allocation3 [shape = 's32[1]{0}', space=sflag, size = 0x4, scoped, tag = 'scoped memory for tpu_custom_call.1']
    %8 = vsyncpa [#allocation3], 0
    // Predicated region
    $region2: #{tpu_custom_call.1} parent=1 // pred_check
      _
    $region3: #{tpu_custom_call.1} parent=1 // pred_check_branch
      %10 = sbr.rel (0) target = $region5
    $region4: #{tpu_custom_call.1} parent=1 // pred_region
      _
    $region5: #{tpu_custom_call.1} parent=1 // pred_fallthru
      _
    // Predicated region
    $region6: #{tpu_custom_call.1} parent=1 // pred_check
      _
    $region7: #{tpu_custom_call.1} parent=1 // pred_check_branch
      %12 = sbr.rel (0) target = $region9
    $region8: #{tpu_custom_call.1} parent=1 // pred_region
      _
    $region9: #{tpu_custom_call.1} parent=1 // pred_fallthru
      _
    // Predicated region
    $region10: #{tpu_custom_call.1} parent=1 // pred_check
      _
    $region11: #{tpu_custom_call.1} parent=1 // pred_check_branch
      %14 = sbr.rel (0) target = $region13
    $region12: #{tpu_custom_call.1} parent=1 // pred_region
      _
    $region13: #{tpu_custom_call.1} parent=1 // pred_fallthru
      _
    %v15 = vld [vmem:[%s0] sm:$0xff]
    %v16 = vld [vmem:[%s0 + $0x8] sm:$0xff]
    %v17 = vld [vmem:[%s1] sm:$0xff]
    %v18 = vld [vmem:[%s1 + $0x8] sm:$0xff]
    %s19 = smul.u32 0, 16
    %v20 = vlaneseq
    %v21 = vshrl.u32 %v20, 7
    %v22 = vadd.s32 %v21, 8
    %v23 = vstv %s19
    %v24 = vadd.s32 %v23, %v21
    %v25 = vadd.s32 %v23, %v22
    %vm26 = vcmp.lt.s32.totalorder %v24, 16
    %vm27 = vcmp.lt.s32.totalorder %v25, 16
    %vm28 = vcmask 261120
    %v29 = vsel %vm28, %v15, -inf
    %30 = vmax.xlane.f32.xlu0 %v29
    %v31 = vpop.xlane.xlu0 %30
    %v32 = vsel %vm28, %v16, -inf
    %33 = vmax.xlane.f32.xlu0 %v32
    %v34 = vpop.xlane.xlu0 %33
    %v35 = vsub.f32 %v15, %v31
    %v36 = vsub.f32 %v16, %v34
    %v37 = vlaneseq
    %v38 = vand.u32 %v37, 127
    %v39 = vmul.f32 %v35, 1.442695
    %v40 = vpow.pop %v39
    %v41 = vmul.f32 %v36, 1.442695
    %v42 = vpow.pop %v41
    %v43 = vsel %vm28, %v40, 0.0
    %44 = vadd.xlane.f32.xlu0 %v43
    %v45 = vpop.xlane.xlu0 %44
    %v46 = vsel %vm28, %v42, 0.0
    %47 = vadd.xlane.f32.xlu0 %v46
    %v48 = vpop.xlane.xlu0 %47
    %49 = vset.pattern.permute.xlu0 0
    %50 = vperm.xlu0 %49, %v17
    %v51 = vpop.permute.xlu0 %50
    %52 = vset.pattern.permute.xlu0 0
    %53 = vperm.xlu0 %52, %v18
    %v54 = vpop.permute.xlu0 %53
    %vm55 = vcmp.eq.s32.totalorder %v38, %v51
    %vm56 = vcmp.eq.s32.totalorder %v38, %v54
    %v57 = vsel %vm55, %v35, 0.0
    %v58 = vsel %vm56, %v36, 0.0
    %v59 = vsel %vm28, %v57, 0.0
    %60 = vadd.xlane.f32.xlu0 %v59
    %v61 = vpop.xlane.xlu0 %60
    %v62 = vsel %vm28, %v58, 0.0
    %63 = vadd.xlane.f32.xlu0 %v62
    %v64 = vpop.xlane.xlu0 %63
    %v65 = vlog2.pop %v45
    %v66 = vmul.f32 %v65, 0.6931472
    %v67 = vlog2.pop %v48
    %v68 = vmul.f32 %v67, 0.6931472
    %v69 = vsub.f32 %v66, %v61
    %v70 = vsub.f32 %v68, %v64
    %vm71 = vcmp.ne.s32.totalorder %v17, 0
    %vm72 = vcmp.ne.s32.totalorder %v18, 0
    %vm73 = vmand %vm71, %vm26
    %vm74 = vmand %vm72, %vm27
    %v75 = vsel %vm73, %v69, 0.0
    %v76 = vsel %vm74, %v70, 0.0
    %vm77 = vcmask 7168
    %v78 = vsel %vm77, %v75, 0.0
    %v79 = vsel %vm77, %v76, 0.0
    %v80 = vadd.f32 %v78, %v79
    %81 = vadd.xlane.f32.xlu0 %v80
    %v82 = vpop.xlane.xlu0 %81
    %v83 = vrot.slane %v82, 4
    %v84 = vadd.f32 %v82, %v83
    %v85 = vrot.slane %v84, 2
    %v86 = vadd.f32 %v84, %v85
    %v87 = vrot.slane %v86, 1
    %v88 = vadd.f32 %v86, %v87
    %s89 = vtos %v88
    %v90 = vsel %vm73, 1.0, 0.0
    %v91 = vsel %vm74, 1.0, 0.0
    %v92 = vsel %vm77, %v90, 0.0
    %v93 = vsel %vm77, %v91, 0.0
    %v94 = vadd.f32 %v92, %v93
    %95 = vadd.xlane.f32.xlu0 %v94
    %v96 = vpop.xlane.xlu0 %95
    %v97 = vrot.slane %v96, 4
    %v98 = vadd.f32 %v96, %v97
    %v99 = vrot.slane %v98, 2
    %v100 = vadd.f32 %v98, %v99
    %v101 = vrot.slane %v100, 1
    %v102 = vadd.f32 %v100, %v101
    %s103 = vtos %v102
    %v104 = vld [vmem:[%s2] sm:$0xff]
    %v105 = vld [vmem:[%s2 + $0x8] sm:$0xff]
    %vm106 = vcmp.gt.f32.partialorder %v104, 0.5
    %vm107 = vcmp.gt.f32.partialorder %v105, 0.5
    %vm108 = vmand %vm106, %vm26
    %vm109 = vmand %vm107, %vm27
    %112 = vrot.lane.b32.xlu0 %v104, 127
    %v113 = vpop.permute.xlu0 %112
    %114 = vrot.lane.b32.xlu0 %v105, 127
    %v115 = vpop.permute.xlu0 %114
    %v118 = vsub.f32 %v104, %v113
    %v119 = vsub.f32 %v105, %v115
    %v120 = vmul.f32 %v118, %v118
    %v121 = vmul.f32 %v119, %v119
    %124 = vrot.lane.b32.xlu0 %v120, 2
    %v125 = vpop.permute.xlu0 %124
    %126 = vrot.lane.b32.xlu0 %v121, 2
    %v127 = vpop.permute.xlu0 %126
    %v130 = vsel %vm108, %v125, 0.0
    %v131 = vsel %vm109, %v127, 0.0
    %134 = vrot.lane.b32.xlu0 %v130, 126
    %v135 = vpop.permute.xlu0 %134
    %136 = vrot.lane.b32.xlu0 %v131, 126
    %v137 = vpop.permute.xlu0 %136
    %v140 = vsel %vm77, %v135, 0.0
    %v141 = vsel %vm77, %v137, 0.0
    %v142 = vadd.f32 %v140, %v141
    %143 = vadd.xlane.f32.xlu0 %v142
    %v144 = vpop.xlane.xlu0 %143
    %v145 = vrot.slane %v144, 4
    %v146 = vadd.f32 %v144, %v145
    %v147 = vrot.slane %v146, 2
    %v148 = vadd.f32 %v146, %v147
    %v149 = vrot.slane %v148, 1
    %v150 = vadd.f32 %v148, %v149
    %s151 = vtos %v150
    %v152 = vsel %vm108, 1.0, 0.0
    %v153 = vsel %vm109, 1.0, 0.0
    %156 = vrot.lane.b32.xlu0 %v152, 126
    %v157 = vpop.permute.xlu0 %156
    %158 = vrot.lane.b32.xlu0 %v153, 126
    %v159 = vpop.permute.xlu0 %158
    %v162 = vsel %vm77, %v157, 0.0
    %v163 = vsel %vm77, %v159, 0.0
    %v164 = vadd.f32 %v162, %v163
    %165 = vadd.xlane.f32.xlu0 %v164
    %v166 = vpop.xlane.xlu0 %165
    %v167 = vrot.slane %v166, 4
    %v168 = vadd.f32 %v166, %v167
    %v169 = vrot.slane %v168, 2
    %v170 = vadd.f32 %v168, %v169
    %v171 = vrot.slane %v170, 1
    %v172 = vadd.f32 %v170, %v171
    %s173 = vtos %v172
    %vm174 = vcmp.eq.s32.totalorder %v38, 0
    %v175 = vstv %s89
    %v176 = vsel %vm174, %v175, 0.0
    %vm177 = vcmp.eq.s32.totalorder %v38, 1
    %v178 = vstv %s103
    %v179 = vsel %vm177, %v178, 0.0
    %v180 = vadd.f32 %v176, %v179
    %vm181 = vcmp.eq.s32.totalorder %v38, 2
    %v182 = vstv %s151
    %v183 = vsel %vm181, %v182, 0.0
    %v184 = vadd.f32 %v180, %v183
    %vm185 = vcmp.eq.s32.totalorder %v38, 3
    %v186 = vstv %s173
    %v187 = vsel %vm185, %v186, 0.0
    %v188 = vadd.f32 %v184, %v187
    %189 = vst [vmem:[#allocation2] sm:$0xff] %v188
    // Predicated region
    $region14: #{tpu_custom_call.1} parent=1 // pred_check
      _
    $region15: #{tpu_custom_call.1} parent=1 // pred_check_branch
      %191 = sbr.rel (0) target = $region17
    $region16: #{tpu_custom_call.1} parent=1 // pred_region
      %s193 = ssub.s32 128, 128
      %194 = vsyncadd [#allocation3], %s193
      %s196 = sshll.u32 [#allocation2], 4
      %s197 = int_to_ptr.vmem [resolvable:$true] %s196
      %199 = dma.vmem_to_hbm [thread:$0]  %s197, 128, %s3, [#allocation3]
    $region17: #{tpu_custom_call.1} parent=1 // pred_fallthru
      _
    // Predicated region
    $region18: #{tpu_custom_call.1} parent=1 // pred_check
      _
    $region19: #{tpu_custom_call.1} parent=1 // pred_check_branch
      %201 = sbr.rel (0) target = $region21
    $region20: #{tpu_custom_call.1} parent=1 // pred_region
      %202 = dma.done [#allocation3], 128
    $region21: #{tpu_custom_call.1} parent=1 // pred_fallthru
      _
    %203 = vsyncpa [#allocation3], 1

</llo_original>
